<compile_context>
chip_gen: v7x
topology: tpu7x:2x2x1
jax: 0.10.0
libtpu: 0.0.40
codegen_flags: <defaults>
</compile_context>

<pallas_src>
import jax
import jax.numpy as jnp
from jax.experimental import pallas as pl
from jax.experimental.pallas import tpu as pltpu

IN_FEATURES = 2048
OUT_FEATURES = 3
OUT_PAD = 128        # pad the 3 output classes to one full lane group (lane-dense stores)
MAX_TILE_M = 512     # f32 x tile: 512*2048*4 = 4 MiB; x2 double-buffered = 8 MiB (fits v7x)


def _round_up(x, m):
    return -(-x // m) * m


def _choose_tile_m(n: int) -> int:
    """Batch tile size (static, derived from the traced shape).

    * n <= 128: a single full-extent block (exempt from the (8,128) rule,
      no per-grid-step overhead for the tiny-batch / demo case).
    * otherwise: >= 2 tiles (enables v7x megacore sharding), multiple of 8,
      capped at MAX_TILE_M so double-buffered f32 tiles stay well inside the
      default scoped VMEM limit on every generation.
    """
    if n <= 128:
        return n
    return min(MAX_TILE_M, _round_up(pl.cdiv(n, 2), 8))


def _linear_kernel(x_ref, w_ref, b_ref, o_ref):
    # x_ref: (TM, 2048) f32 (or bf16)   w_ref: (2048, 128) bf16
    # b_ref: (1, 128) f32               o_ref: (TM, 128) f32
    x = x_ref[...].astype(jnp.bfloat16)                 # in-kernel cast (single HBM pass)
    acc = jnp.dot(x, w_ref[...],
                  preferred_element_type=jnp.float32)   # MXU matmul, f32 accumulation
    o_ref[...] = acc + b_ref[...]                       # f32 epilogue (v5e-friendly)


def prepare_params(weight, bias):
    """One-time parameter prep — hoisted out of the per-call path.

    weight : (3, 2048) f32  -- PyTorch Linear layout [out, in]
    bias   : (3,)      f32
    returns (w_kt, b_pad): ((2048, 128) bf16 K-major RHS, (1, 128) f32)
    """
    w_kt = (jnp.zeros((IN_FEATURES, OUT_PAD), jnp.bfloat16)
            .at[:, :OUT_FEATURES].set(weight.T.astype(jnp.bfloat16)))
    b_pad = jnp.zeros((1, OUT_PAD), jnp.float32).at[0, :OUT_FEATURES].set(bias)
    return w_kt, b_pad


@jax.jit
def net_forward(x_nchw, w_kt, b_pad):
    """Forward pass of Net's own layers given backbone features.

    x_nchw : (N, 2048, 1, 1) float32 (bf16 also accepted) -- output of resnet_layer
    w_kt   : (2048, 128) bfloat16    -- from prepare_params
    b_pad  : (1, 128)    float32     -- from prepare_params
    returns: (N, 3) float32
    """
    n = x_nchw.shape[0]
    x_flat = x_nchw.reshape(n, -1)            # x.view(x.size(0), -1), free metadata reshape
    assert x_flat.shape[1] == IN_FEATURES

    tm = _choose_tile_m(n)
    grid = (pl.cdiv(n, tm),)

    cost = pl.CostEstimate(
        flops=2 * n * IN_FEATURES * OUT_PAD,
        transcendentals=0,
        bytes_accessed=(x_flat.size * x_flat.dtype.itemsize   # activations streamed once
                        + w_kt.size * 2                       # bf16 weight, VMEM-resident
                        + b_pad.size * 4
                        + n * OUT_PAD * 4),                   # f32 padded output
    )

    out_pad = pl.pallas_call(
        _linear_kernel,
        out_shape=jax.ShapeDtypeStruct((n, OUT_PAD), jnp.float32),
        grid=grid,
        in_specs=[
            # x: tiled over the batch axis (ragged tail handled by Pallas masking).
            pl.BlockSpec((tm, IN_FEATURES), lambda i: (i, 0)),
            # weight / bias: same block every step -> stay resident in VMEM.
            pl.BlockSpec((IN_FEATURES, OUT_PAD), lambda i: (0, 0)),
            pl.BlockSpec((1, OUT_PAD), lambda i: (0, 0)),
        ],
        out_specs=pl.BlockSpec((tm, OUT_PAD), lambda i: (i, 0)),
        compiler_params=pltpu.CompilerParams(
            dimension_semantics=("parallel",)),   # megacore sharding on v7x
        cost_estimate=cost,
    )(x_flat, w_kt, b_pad)

    return out_pad[:, :OUT_FEATURES]


if __name__ == "__main__":
    key = jax.random.PRNGKey(0)
    k_x, k_w, k_b, k_x2 = jax.random.split(key, 4)

    # Deterministic Linear(2048, 3) parameters (PyTorch layout: weight [out, in]).
    bound = 1.0 / (IN_FEATURES ** 0.5)
    weight = jax.random.uniform(k_w, (OUT_FEATURES, IN_FEATURES), jnp.float32, -bound, bound)
    bias = jax.random.uniform(k_b, (OUT_FEATURES,), jnp.float32, -bound, bound)

    # One-time parameter transpose/pad/cast (hoisted out of the forward path).
    w_kt, b_pad = prepare_params(weight, bias)

    def reference(x_nchw):
        # Same bf16 operand precision as the kernel, f32 accumulation.
        xq = x_nchw.reshape(x_nchw.shape[0], -1).astype(jnp.bfloat16).astype(jnp.float32)
        wq = weight.astype(jnp.bfloat16).astype(jnp.float32)
        return xq @ wq.T + bias

    # Small-batch path: single full-extent block (demo shape from the module).
    batch = 2
    x = jax.random.normal(k_x, (batch, IN_FEATURES, 1, 1), dtype=jnp.float32)
    out = jax.block_until_ready(net_forward(x, w_kt, b_pad))
    assert out.shape == (batch, OUT_FEATURES)
    assert jnp.allclose(out, reference(x), atol=2e-3, rtol=2e-3)

    # Tiled path: 2 grid steps (TM=136) with a ragged tail tile.
    batch2 = 260
    x2 = jax.random.normal(k_x2, (batch2, IN_FEATURES, 1, 1), dtype=jnp.float32)
    out2 = jax.block_until_ready(net_forward(x2, w_kt, b_pad))
    assert out2.shape == (batch2, OUT_FEATURES)
    assert jnp.allclose(out2, reference(x2), atol=2e-3, rtol=2e-3)

    print("KERNEL_OK")
</pallas_src>

<mosaic_0001>
module attributes {stable_mosaic.version = 11 : i64} {
  func.func @_linear_kernel(%arg0: i32, %arg1: memref<2x2048xf32, #tpu.memory_space<vmem>>, %arg2: memref<2048x128xbf16, #tpu.memory_space<vmem>>, %arg3: memref<1x128xf32, #tpu.memory_space<vmem>>, %arg4: memref<2x128xf32, #tpu.memory_space<vmem>>) attributes {dimension_semantics = [#tpu.dimension_semantics<parallel>], iteration_bounds = array<i64: 1>, scalar_prefetch = 0 : i64, scratch_operands = 0 : i64, tpu.core_type = #tpu.core_type<tc>, window_params = [{transform_indices = @transform_0, window_bounds = array<i64: 2, 2048>}, {pipeline_mode = #tpu.pipeline_mode<synchronous>, transform_indices = @transform_1, window_bounds = array<i64: 2048, 128>}, {pipeline_mode = #tpu.pipeline_mode<synchronous>, transform_indices = @transform_2, window_bounds = array<i64: 1, 128>}, {transform_indices = @transform_3, window_bounds = array<i64: 2, 128>}]} {
    %c0 = arith.constant 0 : index
    %c0_0 = arith.constant 0 : index
    %0 = vector.load %arg1[%c0, %c0_0] : memref<2x2048xf32, #tpu.memory_space<vmem>>, vector<2x2048xf32>
    %1 = arith.truncf %0 : vector<2x2048xf32> to vector<2x2048xbf16>
    %c0_1 = arith.constant 0 : index
    %c0_2 = arith.constant 0 : index
    %2 = vector.load %arg2[%c0_1, %c0_2] : memref<2048x128xbf16, #tpu.memory_space<vmem>>, vector<2048x128xbf16>
    %cst = arith.constant dense<0.000000e+00> : vector<2x128xf32>
    %3 = tpu.matmul %1, %2, %cst {dimension_numbers = #tpu.dot_dimension_numbers<[1], [0], [0], [1], [0, 0, 1, 1], [], []>} : vector<2x2048xbf16>, vector<2048x128xbf16>, vector<2x128xf32> -> vector<2x128xf32>
    %c0_3 = arith.constant 0 : index
    %c0_4 = arith.constant 0 : index
    %4 = vector.load %arg3[%c0_3, %c0_4] : memref<1x128xf32, #tpu.memory_space<vmem>>, vector<1x128xf32>
    %5 = vector.broadcast %4 : vector<1x128xf32> to vector<2x128xf32>
    %6 = arith.addf %3, %5 : vector<2x128xf32>
    %c0_5 = arith.constant 0 : index
    %c0_6 = arith.constant 0 : index
    %7 = vector.load %arg4[%c0_5, %c0_6] : memref<2x128xf32, #tpu.memory_space<vmem>>, vector<2x128xf32>
    tpu.vector_store %arg4[%c0_5, %c0_6], %6 {strides = array<i32>} : memref<2x128xf32, #tpu.memory_space<vmem>>, vector<2x128xf32>,
    return
  }
  func.func @transform_0(%arg0: i32) -> (i32, i32) {
    %c0_i32 = arith.constant 0 : i32
    %c0_i32_0 = arith.constant 0 : i32
    return %arg0, %c0_i32 : i32, i32
  }
  func.func @transform_1(%arg0: i32) -> (i32, i32) {
    %c0_i32 = arith.constant 0 : i32
    %c0_i32_0 = arith.constant 0 : i32
    %c0_i32_1 = arith.constant 0 : i32
    return %c0_i32, %c0_i32_0 : i32, i32
  }
  func.func @transform_2(%arg0: i32) -> (i32, i32) {
    %c0_i32 = arith.constant 0 : i32
    %c0_i32_0 = arith.constant 0 : i32
    %c0_i32_1 = arith.constant 0 : i32
    return %c0_i32, %c0_i32_0 : i32, i32
  }
  func.func @transform_3(%arg0: i32) -> (i32, i32) {
    %c0_i32 = arith.constant 0 : i32
    %c0_i32_0 = arith.constant 0 : i32
    return %arg0, %c0_i32 : i32, i32
  }
}

</mosaic_0001>

<llo_original>
// kernel: net_forward.1
$region0: #{net_forward.1}
  #allocation0 [shape = 'u32[]', space=smem, size = 0x4, offset = 0x4, fixed_abs, tag = 'smem constant byte address 0x4 - core index']
  #allocation1 [shape = 'u32[144,128]{1,0:T(1,128)}', space=vmem, size = 0x12000, scoped, tag = 'internal scratch']
  %s0 = inlined_call_operand.vmem [shape: f32[2,2048], index: 0, kind: input, shape index: {}]
  %s1 = inlined_call_operand.hbm [shape: bf16[2048,128], index: 1, kind: input, shape index: {}]
  %s2 = inlined_call_operand.vmem [shape: f32[1,128], index: 2, kind: input, shape index: {}]
  %s3 = inlined_call_operand.hbm [shape: f32[2,128], index: 3, kind: output, shape index: {}]
  %s4 = sld [smem:[#allocation0]]
  $region26: #{net_forward.1} parent=0
    _
  %s6 = ssub.s32 1, %s4
  %s7 = scalar_select 0, %s6, %s4
  $region1: #{net_forward.1} parent=0
    #allocation2 [shape = 'u8[524288]{0}', space=vmem, size = 0x80000, scoped, tag = 'input window, operand 1, single buffered']
    #allocation3 [shape = 's32[1]{0}', space=sflag, size = 0x4, scoped, tag = 'scoped memory for net_forward.1']
    #allocation4 [shape = 's32[1]{0}', space=sflag, size = 0x4, scoped, tag = 'scoped memory for net_forward.1']
    #allocation5 [shape = 'u8[1024]{0}', space=vmem, size = 0x400, scoped, tag = 'output window, operand 0, single buffered']
    %8 = vsyncpa [#allocation3], 0
    %9 = vsyncpa [#allocation4], 0
    // Predicated region
    $region2: #{net_forward.1} parent=1 // pred_check
      _
    $region3: #{net_forward.1} parent=1 // pred_check_branch
      %11 = sbr.rel (0) target = $region5
    $region4: #{net_forward.1} parent=1 // pred_region
      _
    $region5: #{net_forward.1} parent=1 // pred_fallthru
      _
    // Predicated region
    $region6: #{net_forward.1} parent=1 // pred_check
      _
    $region7: #{net_forward.1} parent=1 // pred_check_branch
      %13 = sbr.rel (0) target = $region9
    $region8: #{net_forward.1} parent=1 // pred_region
      %s15 = ssub.s32 16384, 16384
      %16 = vsyncadd [#allocation3], %s15
      %s17 = sshll.u32 [#allocation2], 4
      %s18 = int_to_ptr.vmem [resolvable:$true] %s17
      %23 = dma.hbm_to_vmem [thread:$0]  %s1, 16384, %s18, [#allocation3], 64, 64, 4
    $region9: #{net_forward.1} parent=1 // pred_fallthru
      _
    // Predicated region
    $region10: #{net_forward.1} parent=1 // pred_check
      _
    $region11: #{net_forward.1} parent=1 // pred_check_branch
      %25 = sbr.rel (0) target = $region13
    $region12: #{net_forward.1} parent=1 // pred_region
      _
    $region13: #{net_forward.1} parent=1 // pred_fallthru
      _
    // Predicated region
    $region14: #{net_forward.1} parent=1 // pred_check
      _
    $region15: #{net_forward.1} parent=1 // pred_check_branch
      %27 = sbr.rel (0) target = $region17
    $region16: #{net_forward.1} parent=1 // pred_region
      %28 = dma.done [#allocation3], 16384
    $region17: #{net_forward.1} parent=1 // pred_fallthru
      _
    %v30 = vld [vmem:[%s0] sm:$0xff]
    %v31 = vld [vmem:[%s0 + $0x8] sm:$0xff]
    %v32 = vld [vmem:[%s0 + $0x10] sm:$0xff]
    %v33 = vld [vmem:[%s0 + $0x18] sm:$0xff]
    %v38 = vcombine.high %v30, %v30
    %v40 = vunpack.c.l.s4 1983009808
    %v41 = vunpack.c.0.s8 %v40
    %v42 = vlaneseq
    %v43 = vshrl.u32 %v42, 7
    %v44 = vsub.s32 %v41, %v43
    %v45 = vrot.slane %v30, %v44
    %v47 = vunpack.c.l.s4 1983009808
    %v48 = vunpack.c.0.s8 %v47
    %v49 = vlaneseq
    %v50 = vshrl.u32 %v49, 7
    %v51 = vsub.s32 %v48, %v50
    %v52 = vrot.slane %v38, %v51
    %v53 = vcombine.high %v45, %v45
    %v54 = vcombine.high %v52, %v52
    %v55 = vcombine.high %v31, %v31
    %v57 = vunpack.c.l.s4 1983009808
    %v58 = vunpack.c.0.s8 %v57
    %v59 = vlaneseq
    %v60 = vshrl.u32 %v59, 7
    %v61 = vsub.s32 %v58, %v60
    %v62 = vrot.slane %v31, %v61
    %v64 = vunpack.c.l.s4 1983009808
    %v65 = vunpack.c.0.s8 %v64
    %v66 = vlaneseq
    %v67 = vshrl.u32 %v66, 7
    %v68 = vsub.s32 %v65, %v67
    %v69 = vrot.slane %v55, %v68
    %v70 = vcombine.high %v62, %v62
    %v71 = vcombine.high %v69, %v69
    %v72 = vcombine.high %v32, %v32
    %v74 = vunpack.c.l.s4 1983009808
    %v75 = vunpack.c.0.s8 %v74
    %v76 = vlaneseq
    %v77 = vshrl.u32 %v76, 7
    %v78 = vsub.s32 %v75, %v77
    %v79 = vrot.slane %v32, %v78
    %v81 = vunpack.c.l.s4 1983009808
    %v82 = vunpack.c.0.s8 %v81
    %v83 = vlaneseq
    %v84 = vshrl.u32 %v83, 7
    %v85 = vsub.s32 %v82, %v84
    %v86 = vrot.slane %v72, %v85
    %v87 = vcombine.high %v79, %v79
    %v88 = vcombine.high %v86, %v86
    %v89 = vcombine.high %v33, %v33
    %v91 = vunpack.c.l.s4 1983009808
    %v92 = vunpack.c.0.s8 %v91
    %v93 = vlaneseq
    %v94 = vshrl.u32 %v93, 7
    %v95 = vsub.s32 %v92, %v94
    %v96 = vrot.slane %v33, %v95
    %v98 = vunpack.c.l.s4 1983009808
    %v99 = vunpack.c.0.s8 %v98
    %v100 = vlaneseq
    %v101 = vshrl.u32 %v100, 7
    %v102 = vsub.s32 %v99, %v101
    %v103 = vrot.slane %v89, %v102
    %v104 = vcombine.high %v96, %v96
    %v105 = vcombine.high %v103, %v103
    %v122 = vpack.c.bf16 %v45, %v45
    %v123 = vpack.c.bf16 %v53, %v53
    %v124 = vpack.c.bf16 %v52, %v52
    %v125 = vpack.c.bf16 %v54, %v54
    %v126 = vpack.c.bf16 %v62, %v62
    %v127 = vpack.c.bf16 %v70, %v70
    %v128 = vpack.c.bf16 %v69, %v69
    %v129 = vpack.c.bf16 %v71, %v71
    %v130 = vpack.c.bf16 %v79, %v79
    %v131 = vpack.c.bf16 %v87, %v87
    %v132 = vpack.c.bf16 %v86, %v86
    %v133 = vpack.c.bf16 %v88, %v88
    %v134 = vpack.c.bf16 %v96, %v96
    %v135 = vpack.c.bf16 %v104, %v104
    %v136 = vpack.c.bf16 %v103, %v103
    %v137 = vpack.c.bf16 %v105, %v105
    %v138 = vld [vmem:[#allocation2] sm:$0xf]
    %v139 = vld [vmem:[#allocation2 + $0x4] sm:$0xf]
    %v140 = vld [vmem:[#allocation2 + $0x8] sm:$0xf]
    %v141 = vld [vmem:[#allocation2 + $0xc] sm:$0xf]
    %v142 = vld [vmem:[#allocation2 + $0x10] sm:$0xf]
    %v143 = vld [vmem:[#allocation2 + $0x14] sm:$0xf]
    %v144 = vld [vmem:[#allocation2 + $0x18] sm:$0xf]
    %v145 = vld [vmem:[#allocation2 + $0x1c] sm:$0xf]
    %v146 = vld [vmem:[#allocation2 + $0x20] sm:$0xf]
    %v147 = vld [vmem:[#allocation2 + $0x24] sm:$0xf]
    %v148 = vld [vmem:[#allocation2 + $0x28] sm:$0xf]
    %v149 = vld [vmem:[#allocation2 + $0x2c] sm:$0xf]
    %v150 = vld [vmem:[#allocation2 + $0x30] sm:$0xf]
    %v151 = vld [vmem:[#allocation2 + $0x34] sm:$0xf]
    %v152 = vld [vmem:[#allocation2 + $0x38] sm:$0xf]
    %v153 = vld [vmem:[#allocation2 + $0x3c] sm:$0xf]
    %v154 = vld [vmem:[#allocation2 + $0x40] sm:$0xf]
    %v155 = vld [vmem:[#allocation2 + $0x44] sm:$0xf]
    %v156 = vld [vmem:[#allocation2 + $0x48] sm:$0xf]
    %v157 = vld [vmem:[#allocation2 + $0x4c] sm:$0xf]
    %v158 = vld [vmem:[#allocation2 + $0x50] sm:$0xf]
    %v159 = vld [vmem:[#allocation2 + $0x54] sm:$0xf]
    %v160 = vld [vmem:[#allocation2 + $0x58] sm:$0xf]
    %v161 = vld [vmem:[#allocation2 + $0x5c] sm:$0xf]
    %v162 = vld [vmem:[#allocation2 + $0x60] sm:$0xf]
    %v163 = vld [vmem:[#allocation2 + $0x64] sm:$0xf]
    %v164 = vld [vmem:[#allocation2 + $0x68] sm:$0xf]
    %v165 = vld [vmem:[#allocation2 + $0x6c] sm:$0xf]
    %v166 = vld [vmem:[#allocation2 + $0x70] sm:$0xf]
    %v167 = vld [vmem:[#allocation2 + $0x74] sm:$0xf]
    %v168 = vld [vmem:[#allocation2 + $0x78] sm:$0xf]
    %v169 = vld [vmem:[#allocation2 + $0x7c] sm:$0xf]
    %v170 = vld [vmem:[#allocation2 + $0x80] sm:$0xf]
    %v171 = vld [vmem:[#allocation2 + $0x84] sm:$0xf]
    %v172 = vld [vmem:[#allocation2 + $0x88] sm:$0xf]
    %v173 = vld [vmem:[#allocation2 + $0x8c] sm:$0xf]
    %v174 = vld [vmem:[#allocation2 + $0x90] sm:$0xf]
    %v175 = vld [vmem:[#allocation2 + $0x94] sm:$0xf]
    %v176 = vld [vmem:[#allocation2 + $0x98] sm:$0xf]
    %v177 = vld [vmem:[#allocation2 + $0x9c] sm:$0xf]
    %v178 = vld [vmem:[#allocation2 + $0xa0] sm:$0xf]
    %v179 = vld [vmem:[#allocation2 + $0xa4] sm:$0xf]
    %v180 = vld [vmem:[#allocation2 + $0xa8] sm:$0xf]
    %v181 = vld [vmem:[#allocation2 + $0xac] sm:$0xf]
    %v182 = vld [vmem:[#allocation2 + $0xb0] sm:$0xf]
    %v183 = vld [vmem:[#allocation2 + $0xb4] sm:$0xf]
    %v184 = vld [vmem:[#allocation2 + $0xb8] sm:$0xf]
    %v185 = vld [vmem:[#allocation2 + $0xbc] sm:$0xf]
    %v186 = vld [vmem:[#allocation2 + $0xc0] sm:$0xf]
    %v187 = vld [vmem:[#allocation2 + $0xc4] sm:$0xf]
    %v188 = vld [vmem:[#allocation2 + $0xc8] sm:$0xf]
    %v189 = vld [vmem:[#allocation2 + $0xcc] sm:$0xf]
    %v190 = vld [vmem:[#allocation2 + $0xd0] sm:$0xf]
    %v191 = vld [vmem:[#allocation2 + $0xd4] sm:$0xf]
    %v192 = vld [vmem:[#allocation2 + $0xd8] sm:$0xf]
    %v193 = vld [vmem:[#allocation2 + $0xdc] sm:$0xf]
    %v194 = vld [vmem:[#allocation2 + $0xe0] sm:$0xf]
    %v195 = vld [vmem:[#allocation2 + $0xe4] sm:$0xf]
    %v196 = vld [vmem:[#allocation2 + $0xe8] sm:$0xf]
    %v197 = vld [vmem:[#allocation2 + $0xec] sm:$0xf]
    %v198 = vld [vmem:[#allocation2 + $0xf0] sm:$0xf]
    %v199 = vld [vmem:[#allocation2 + $0xf4] sm:$0xf]
    %v200 = vld [vmem:[#allocation2 + $0xf8] sm:$0xf]
    %v201 = vld [vmem:[#allocation2 + $0xfc] sm:$0xf]
    %v202 = vld [vmem:[#allocation2 + $0x100] sm:$0xf]
    %v203 = vld [vmem:[#allocation2 + $0x104] sm:$0xf]
    %v204 = vld [vmem:[#allocation2 + $0x108] sm:$0xf]
    %v205 = vld [vmem:[#allocation2 + $0x10c] sm:$0xf]
    %v206 = vld [vmem:[#allocation2 + $0x110] sm:$0xf]
    %v207 = vld [vmem:[#allocation2 + $0x114] sm:$0xf]
    %v208 = vld [vmem:[#allocation2 + $0x118] sm:$0xf]
    %v209 = vld [vmem:[#allocation2 + $0x11c] sm:$0xf]
    %v210 = vld [vmem:[#allocation2 + $0x120] sm:$0xf]
    %v211 = vld [vmem:[#allocation2 + $0x124] sm:$0xf]
    %v212 = vld [vmem:[#allocation2 + $0x128] sm:$0xf]
    %v213 = vld [vmem:[#allocation2 + $0x12c] sm:$0xf]
    %v214 = vld [vmem:[#allocation2 + $0x130] sm:$0xf]
    %v215 = vld [vmem:[#allocation2 + $0x134] sm:$0xf]
    %v216 = vld [vmem:[#allocation2 + $0x138] sm:$0xf]
    %v217 = vld [vmem:[#allocation2 + $0x13c] sm:$0xf]
    %v218 = vld [vmem:[#allocation2 + $0x140] sm:$0xf]
    %v219 = vld [vmem:[#allocation2 + $0x144] sm:$0xf]
    %v220 = vld [vmem:[#allocation2 + $0x148] sm:$0xf]
    %v221 = vld [vmem:[#allocation2 + $0x14c] sm:$0xf]
    %v222 = vld [vmem:[#allocation2 + $0x150] sm:$0xf]
    %v223 = vld [vmem:[#allocation2 + $0x154] sm:$0xf]
    %v224 = vld [vmem:[#allocation2 + $0x158] sm:$0xf]
    %v225 = vld [vmem:[#allocation2 + $0x15c] sm:$0xf]
    %v226 = vld [vmem:[#allocation2 + $0x160] sm:$0xf]
    %v227 = vld [vmem:[#allocation2 + $0x164] sm:$0xf]
    %v228 = vld [vmem:[#allocation2 + $0x168] sm:$0xf]
    %v229 = vld [vmem:[#allocation2 + $0x16c] sm:$0xf]
    %v230 = vld [vmem:[#allocation2 + $0x170] sm:$0xf]
    %v231 = vld [vmem:[#allocation2 + $0x174] sm:$0xf]
    %v232 = vld [vmem:[#allocation2 + $0x178] sm:$0xf]
    %v233 = vld [vmem:[#allocation2 + $0x17c] sm:$0xf]
    %v234 = vld [vmem:[#allocation2 + $0x180] sm:$0xf]
    %v235 = vld [vmem:[#allocation2 + $0x184] sm:$0xf]
    %v236 = vld [vmem:[#allocation2 + $0x188] sm:$0xf]
    %v237 = vld [vmem:[#allocation2 + $0x18c] sm:$0xf]
    %v238 = vld [vmem:[#allocation2 + $0x190] sm:$0xf]
    %v239 = vld [vmem:[#allocation2 + $0x194] sm:$0xf]
    %v240 = vld [vmem:[#allocation2 + $0x198] sm:$0xf]
    %v241 = vld [vmem:[#allocation2 + $0x19c] sm:$0xf]
    %v242 = vld [vmem:[#allocation2 + $0x1a0] sm:$0xf]
    %v243 = vld [vmem:[#allocation2 + $0x1a4] sm:$0xf]
    %v244 = vld [vmem:[#allocation2 + $0x1a8] sm:$0xf]
    %v245 = vld [vmem:[#allocation2 + $0x1ac] sm:$0xf]
    %v246 = vld [vmem:[#allocation2 + $0x1b0] sm:$0xf]
    %v247 = vld [vmem:[#allocation2 + $0x1b4] sm:$0xf]
    %v248 = vld [vmem:[#allocation2 + $0x1b8] sm:$0xf]
    %v249 = vld [vmem:[#allocation2 + $0x1bc] sm:$0xf]
    %v250 = vld [vmem:[#allocation2 + $0x1c0] sm:$0xf]
    %v251 = vld [vmem:[#allocation2 + $0x1c4] sm:$0xf]
    %v252 = vld [vmem:[#allocation2 + $0x1c8] sm:$0xf]
    %v253 = vld [vmem:[#allocation2 + $0x1cc] sm:$0xf]
    %v254 = vld [vmem:[#allocation2 + $0x1d0] sm:$0xf]
    %v255 = vld [vmem:[#allocation2 + $0x1d4] sm:$0xf]
    %v256 = vld [vmem:[#allocation2 + $0x1d8] sm:$0xf]
    %v257 = vld [vmem:[#allocation2 + $0x1dc] sm:$0xf]
    %v258 = vld [vmem:[#allocation2 + $0x1e0] sm:$0xf]
    %v259 = vld [vmem:[#allocation2 + $0x1e4] sm:$0xf]
    %v260 = vld [vmem:[#allocation2 + $0x1e8] sm:$0xf]
    %v261 = vld [vmem:[#allocation2 + $0x1ec] sm:$0xf]
    %v262 = vld [vmem:[#allocation2 + $0x1f0] sm:$0xf]
    %v263 = vld [vmem:[#allocation2 + $0x1f4] sm:$0xf]
    %v264 = vld [vmem:[#allocation2 + $0x1f8] sm:$0xf]
    %v265 = vld [vmem:[#allocation2 + $0x1fc] sm:$0xf]
    %v266 = vld [vmem:[#allocation2 + $0x200] sm:$0xf]
    %v267 = vld [vmem:[#allocation2 + $0x204] sm:$0xf]
    %v268 = vld [vmem:[#allocation2 + $0x208] sm:$0xf]
    %v269 = vld [vmem:[#allocation2 + $0x20c] sm:$0xf]
    %v270 = vld [vmem:[#allocation2 + $0x210] sm:$0xf]
    %v271 = vld [vmem:[#allocation2 + $0x214] sm:$0xf]
    %v272 = vld [vmem:[#allocation2 + $0x218] sm:$0xf]
    %v273 = vld [vmem:[#allocation2 + $0x21c] sm:$0xf]
    %v274 = vld [vmem:[#allocation2 + $0x220] sm:$0xf]
    %v275 = vld [vmem:[#allocation2 + $0x224] sm:$0xf]
    %v276 = vld [vmem:[#allocation2 + $0x228] sm:$0xf]
    %v277 = vld [vmem:[#allocation2 + $0x22c] sm:$0xf]
    %v278 = vld [vmem:[#allocation2 + $0x230] sm:$0xf]
    %v279 = vld [vmem:[#allocation2 + $0x234] sm:$0xf]
    %v280 = vld [vmem:[#allocation2 + $0x238] sm:$0xf]
    %v281 = vld [vmem:[#allocation2 + $0x23c] sm:$0xf]
    %v282 = vld [vmem:[#allocation2 + $0x240] sm:$0xf]
    %v283 = vld [vmem:[#allocation2 + $0x244] sm:$0xf]
    %v284 = vld [vmem:[#allocation2 + $0x248] sm:$0xf]
    %v285 = vld [vmem:[#allocation2 + $0x24c] sm:$0xf]
    %v286 = vld [vmem:[#allocation2 + $0x250] sm:$0xf]
    %v287 = vld [vmem:[#allocation2 + $0x254] sm:$0xf]
    %v288 = vld [vmem:[#allocation2 + $0x258] sm:$0xf]
    %v289 = vld [vmem:[#allocation2 + $0x25c] sm:$0xf]
    %v290 = vld [vmem:[#allocation2 + $0x260] sm:$0xf]
    %v291 = vld [vmem:[#allocation2 + $0x264] sm:$0xf]
    %v292 = vld [vmem:[#allocation2 + $0x268] sm:$0xf]
    %v293 = vld [vmem:[#allocation2 + $0x26c] sm:$0xf]
    %v294 = vld [vmem:[#allocation2 + $0x270] sm:$0xf]
    %v295 = vld [vmem:[#allocation2 + $0x274] sm:$0xf]
    %v296 = vld [vmem:[#allocation2 + $0x278] sm:$0xf]
    %v297 = vld [vmem:[#allocation2 + $0x27c] sm:$0xf]
    %v298 = vld [vmem:[#allocation2 + $0x280] sm:$0xf]
    %v299 = vld [vmem:[#allocation2 + $0x284] sm:$0xf]
    %v300 = vld [vmem:[#allocation2 + $0x288] sm:$0xf]
    %v301 = vld [vmem:[#allocation2 + $0x28c] sm:$0xf]
    %v302 = vld [vmem:[#allocation2 + $0x290] sm:$0xf]
    %v303 = vld [vmem:[#allocation2 + $0x294] sm:$0xf]
    %v304 = vld [vmem:[#allocation2 + $0x298] sm:$0xf]
    %v305 = vld [vmem:[#allocation2 + $0x29c] sm:$0xf]
    %v306 = vld [vmem:[#allocation2 + $0x2a0] sm:$0xf]
    %v307 = vld [vmem:[#allocation2 + $0x2a4] sm:$0xf]
    %v308 = vld [vmem:[#allocation2 + $0x2a8] sm:$0xf]
    %v309 = vld [vmem:[#allocation2 + $0x2ac] sm:$0xf]
    %v310 = vld [vmem:[#allocation2 + $0x2b0] sm:$0xf]
    %v311 = vld [vmem:[#allocation2 + $0x2b4] sm:$0xf]
    %v312 = vld [vmem:[#allocation2 + $0x2b8] sm:$0xf]
    %v313 = vld [vmem:[#allocation2 + $0x2bc] sm:$0xf]
    %v314 = vld [vmem:[#allocation2 + $0x2c0] sm:$0xf]
    %v315 = vld [vmem:[#allocation2 + $0x2c4] sm:$0xf]
    %v316 = vld [vmem:[#allocation2 + $0x2c8] sm:$0xf]
    %v317 = vld [vmem:[#allocation2 + $0x2cc] sm:$0xf]
    %v318 = vld [vmem:[#allocation2 + $0x2d0] sm:$0xf]
    %v319 = vld [vmem:[#allocation2 + $0x2d4] sm:$0xf]
    %v320 = vld [vmem:[#allocation2 + $0x2d8] sm:$0xf]
    %v321 = vld [vmem:[#allocation2 + $0x2dc] sm:$0xf]
    %v322 = vld [vmem:[#allocation2 + $0x2e0] sm:$0xf]
    %v323 = vld [vmem:[#allocation2 + $0x2e4] sm:$0xf]
    %v324 = vld [vmem:[#allocation2 + $0x2e8] sm:$0xf]
    %v325 = vld [vmem:[#allocation2 + $0x2ec] sm:$0xf]
    %v326 = vld [vmem:[#allocation2 + $0x2f0] sm:$0xf]
    %v327 = vld [vmem:[#allocation2 + $0x2f4] sm:$0xf]
    %v328 = vld [vmem:[#allocation2 + $0x2f8] sm:$0xf]
    %v329 = vld [vmem:[#allocation2 + $0x2fc] sm:$0xf]
    %v330 = vld [vmem:[#allocation2 + $0x300] sm:$0xf]
    %v331 = vld [vmem:[#allocation2 + $0x304] sm:$0xf]
    %v332 = vld [vmem:[#allocation2 + $0x308] sm:$0xf]
    %v333 = vld [vmem:[#allocation2 + $0x30c] sm:$0xf]
    %v334 = vld [vmem:[#allocation2 + $0x310] sm:$0xf]
    %v335 = vld [vmem:[#allocation2 + $0x314] sm:$0xf]
    %v336 = vld [vmem:[#allocation2 + $0x318] sm:$0xf]
    %v337 = vld [vmem:[#allocation2 + $0x31c] sm:$0xf]
    %v338 = vld [vmem:[#allocation2 + $0x320] sm:$0xf]
    %v339 = vld [vmem:[#allocation2 + $0x324] sm:$0xf]
    %v340 = vld [vmem:[#allocation2 + $0x328] sm:$0xf]
    %v341 = vld [vmem:[#allocation2 + $0x32c] sm:$0xf]
    %v342 = vld [vmem:[#allocation2 + $0x330] sm:$0xf]
    %v343 = vld [vmem:[#allocation2 + $0x334] sm:$0xf]
    %v344 = vld [vmem:[#allocation2 + $0x338] sm:$0xf]
    %v345 = vld [vmem:[#allocation2 + $0x33c] sm:$0xf]
    %v346 = vld [vmem:[#allocation2 + $0x340] sm:$0xf]
    %v347 = vld [vmem:[#allocation2 + $0x344] sm:$0xf]
    %v348 = vld [vmem:[#allocation2 + $0x348] sm:$0xf]
    %v349 = vld [vmem:[#allocation2 + $0x34c] sm:$0xf]
    %v350 = vld [vmem:[#allocation2 + $0x350] sm:$0xf]
    %v351 = vld [vmem:[#allocation2 + $0x354] sm:$0xf]
    %v352 = vld [vmem:[#allocation2 + $0x358] sm:$0xf]
    %v353 = vld [vmem:[#allocation2 + $0x35c] sm:$0xf]
    %v354 = vld [vmem:[#allocation2 + $0x360] sm:$0xf]
    %v355 = vld [vmem:[#allocation2 + $0x364] sm:$0xf]
    %v356 = vld [vmem:[#allocation2 + $0x368] sm:$0xf]
    %v357 = vld [vmem:[#allocation2 + $0x36c] sm:$0xf]
    %v358 = vld [vmem:[#allocation2 + $0x370] sm:$0xf]
    %v359 = vld [vmem:[#allocation2 + $0x374] sm:$0xf]
    %v360 = vld [vmem:[#allocation2 + $0x378] sm:$0xf]
    %v361 = vld [vmem:[#allocation2 + $0x37c] sm:$0xf]
    %v362 = vld [vmem:[#allocation2 + $0x380] sm:$0xf]
    %v363 = vld [vmem:[#allocation2 + $0x384] sm:$0xf]
    %v364 = vld [vmem:[#allocation2 + $0x388] sm:$0xf]
    %v365 = vld [vmem:[#allocation2 + $0x38c] sm:$0xf]
    %v366 = vld [vmem:[#allocation2 + $0x390] sm:$0xf]
    %v367 = vld [vmem:[#allocation2 + $0x394] sm:$0xf]
    %v368 = vld [vmem:[#allocation2 + $0x398] sm:$0xf]
    %v369 = vld [vmem:[#allocation2 + $0x39c] sm:$0xf]
    %v370 = vld [vmem:[#allocation2 + $0x3a0] sm:$0xf]
    %v371 = vld [vmem:[#allocation2 + $0x3a4] sm:$0xf]
    %v372 = vld [vmem:[#allocation2 + $0x3a8] sm:$0xf]
    %v373 = vld [vmem:[#allocation2 + $0x3ac] sm:$0xf]
    %v374 = vld [vmem:[#allocation2 + $0x3b0] sm:$0xf]
    %v375 = vld [vmem:[#allocation2 + $0x3b4] sm:$0xf]
    %v376 = vld [vmem:[#allocation2 + $0x3b8] sm:$0xf]
    %v377 = vld [vmem:[#allocation2 + $0x3bc] sm:$0xf]
    %v378 = vld [vmem:[#allocation2 + $0x3c0] sm:$0xf]
    %v379 = vld [vmem:[#allocation2 + $0x3c4] sm:$0xf]
    %v380 = vld [vmem:[#allocation2 + $0x3c8] sm:$0xf]
    %v381 = vld [vmem:[#allocation2 + $0x3cc] sm:$0xf]
    %v382 = vld [vmem:[#allocation2 + $0x3d0] sm:$0xf]
    %v383 = vld [vmem:[#allocation2 + $0x3d4] sm:$0xf]
    %v384 = vld [vmem:[#allocation2 + $0x3d8] sm:$0xf]
    %v385 = vld [vmem:[#allocation2 + $0x3dc] sm:$0xf]
    %v386 = vld [vmem:[#allocation2 + $0x3e0] sm:$0xf]
    %v387 = vld [vmem:[#allocation2 + $0x3e4] sm:$0xf]
    %v388 = vld [vmem:[#allocation2 + $0x3e8] sm:$0xf]
    %v389 = vld [vmem:[#allocation2 + $0x3ec] sm:$0xf]
    %v390 = vld [vmem:[#allocation2 + $0x3f0] sm:$0xf]
    %v391 = vld [vmem:[#allocation2 + $0x3f4] sm:$0xf]
    %v392 = vld [vmem:[#allocation2 + $0x3f8] sm:$0xf]
    %v393 = vld [vmem:[#allocation2 + $0x3fc] sm:$0xf]
    %v394 = vld [vmem:[%s2] sm:$0x1]
    %v396 = vlaneseq
    %v397 = vshrl.u32 %v396, 7
    %v398 = vsub.s32 0, %v397
    %v399 = vrot.slane %v394, %v398
    %v657 = vunpack.c.l.b16 %v138
    %v658 = vunpack.c.l.b16 %v139
    %v659 = vunpack.c.l.b16 %v140
    %v660 = vunpack.c.l.b16 %v141
    %v661 = vunpack.c.l.b16 %v142
    %v662 = vunpack.c.l.b16 %v143
    %v663 = vunpack.c.l.b16 %v144
    %v664 = vunpack.c.l.b16 %v145
    %v665 = vunpack.c.l.b16 %v146
    %v666 = vunpack.c.l.b16 %v147
    %v667 = vunpack.c.l.b16 %v148
    %v668 = vunpack.c.l.b16 %v149
    %v669 = vunpack.c.l.b16 %v150
    %v670 = vunpack.c.l.b16 %v151
    %v671 = vunpack.c.l.b16 %v152
    %v672 = vunpack.c.l.b16 %v153
    %v673 = vunpack.c.l.b16 %v154
    %v674 = vunpack.c.l.b16 %v155
    %v675 = vunpack.c.l.b16 %v156
    %v676 = vunpack.c.l.b16 %v157
    %v677 = vunpack.c.l.b16 %v158
    %v678 = vunpack.c.l.b16 %v159
    %v679 = vunpack.c.l.b16 %v160
    %v680 = vunpack.c.l.b16 %v161
    %v681 = vunpack.c.l.b16 %v162
    %v682 = vunpack.c.l.b16 %v163
    %v683 = vunpack.c.l.b16 %v164
    %v684 = vunpack.c.l.b16 %v165
    %v685 = vunpack.c.l.b16 %v166
    %v686 = vunpack.c.l.b16 %v167
    %v687 = vunpack.c.l.b16 %v168
    %v688 = vunpack.c.l.b16 %v169
    %v689 = vunpack.c.l.b16 %v170
    %v690 = vunpack.c.l.b16 %v171
    %v691 = vunpack.c.l.b16 %v172
    %v692 = vunpack.c.l.b16 %v173
    %v693 = vunpack.c.l.b16 %v174
    %v694 = vunpack.c.l.b16 %v175
    %v695 = vunpack.c.l.b16 %v176
    %v696 = vunpack.c.l.b16 %v177
    %v697 = vunpack.c.l.b16 %v178
    %v698 = vunpack.c.l.b16 %v179
    %v699 = vunpack.c.l.b16 %v180
    %v700 = vunpack.c.l.b16 %v181
    %v701 = vunpack.c.l.b16 %v182
    %v702 = vunpack.c.l.b16 %v183
    %v703 = vunpack.c.l.b16 %v184
    %v704 = vunpack.c.l.b16 %v185
    %v705 = vunpack.c.l.b16 %v186
    %v706 = vunpack.c.l.b16 %v187
    %v707 = vunpack.c.l.b16 %v188
    %v708 = vunpack.c.l.b16 %v189
    %v709 = vunpack.c.l.b16 %v190
    %v710 = vunpack.c.l.b16 %v191
    %v711 = vunpack.c.l.b16 %v192
    %v712 = vunpack.c.l.b16 %v193
    %v713 = vunpack.c.l.b16 %v194
    %v714 = vunpack.c.l.b16 %v195
    %v715 = vunpack.c.l.b16 %v196
    %v716 = vunpack.c.l.b16 %v197
    %v717 = vunpack.c.l.b16 %v198
    %v718 = vunpack.c.l.b16 %v199
    %v719 = vunpack.c.l.b16 %v200
    %v720 = vunpack.c.l.b16 %v201
    %v721 = vunpack.c.l.b16 %v202
    %v722 = vunpack.c.l.b16 %v203
    %v723 = vunpack.c.l.b16 %v204
    %v724 = vunpack.c.l.b16 %v205
    %v725 = vunpack.c.l.b16 %v206
    %v726 = vunpack.c.l.b16 %v207
    %v727 = vunpack.c.l.b16 %v208
    %v728 = vunpack.c.l.b16 %v209
    %v729 = vunpack.c.l.b16 %v210
    %v730 = vunpack.c.l.b16 %v211
    %v731 = vunpack.c.l.b16 %v212
    %v732 = vunpack.c.l.b16 %v213
    %v733 = vunpack.c.l.b16 %v214
    %v734 = vunpack.c.l.b16 %v215
    %v735 = vunpack.c.l.b16 %v216
    %v736 = vunpack.c.l.b16 %v217
    %v737 = vunpack.c.l.b16 %v218
    %v738 = vunpack.c.l.b16 %v219
    %v739 = vunpack.c.l.b16 %v220
    %v740 = vunpack.c.l.b16 %v221
    %v741 = vunpack.c.l.b16 %v222
    %v742 = vunpack.c.l.b16 %v223
    %v743 = vunpack.c.l.b16 %v224
    %v744 = vunpack.c.l.b16 %v225
    %v745 = vunpack.c.l.b16 %v226
    %v746 = vunpack.c.l.b16 %v227
    %v747 = vunpack.c.l.b16 %v228
    %v748 = vunpack.c.l.b16 %v229
    %v749 = vunpack.c.l.b16 %v230
    %v750 = vunpack.c.l.b16 %v231
    %v751 = vunpack.c.l.b16 %v232
    %v752 = vunpack.c.l.b16 %v233
    %v753 = vunpack.c.l.b16 %v234
    %v754 = vunpack.c.l.b16 %v235
    %v755 = vunpack.c.l.b16 %v236
    %v756 = vunpack.c.l.b16 %v237
    %v757 = vunpack.c.l.b16 %v238
    %v758 = vunpack.c.l.b16 %v239
    %v759 = vunpack.c.l.b16 %v240
    %v760 = vunpack.c.l.b16 %v241
    %v761 = vunpack.c.l.b16 %v242
    %v762 = vunpack.c.l.b16 %v243
    %v763 = vunpack.c.l.b16 %v244
    %v764 = vunpack.c.l.b16 %v245
    %v765 = vunpack.c.l.b16 %v246
    %v766 = vunpack.c.l.b16 %v247
    %v767 = vunpack.c.l.b16 %v248
    %v768 = vunpack.c.l.b16 %v249
    %v769 = vunpack.c.l.b16 %v250
    %v770 = vunpack.c.l.b16 %v251
    %v771 = vunpack.c.l.b16 %v252
    %v772 = vunpack.c.l.b16 %v253
    %v773 = vunpack.c.l.b16 %v254
    %v774 = vunpack.c.l.b16 %v255
    %v775 = vunpack.c.l.b16 %v256
    %v776 = vunpack.c.l.b16 %v257
    %v777 = vunpack.c.l.b16 %v258
    %v778 = vunpack.c.l.b16 %v259
    %v779 = vunpack.c.l.b16 %v260
    %v780 = vunpack.c.l.b16 %v261
    %v781 = vunpack.c.l.b16 %v262
    %v782 = vunpack.c.l.b16 %v263
    %v783 = vunpack.c.l.b16 %v264
    %v784 = vunpack.c.l.b16 %v265
    %v785 = vunpack.c.l.b16 %v266
    %v786 = vunpack.c.l.b16 %v267
    %v787 = vunpack.c.l.b16 %v268
    %v788 = vunpack.c.l.b16 %v269
    %v789 = vunpack.c.l.b16 %v270
    %v790 = vunpack.c.l.b16 %v271
    %v791 = vunpack.c.l.b16 %v272
    %v792 = vunpack.c.l.b16 %v273
    %v793 = vunpack.c.l.b16 %v274
    %v794 = vunpack.c.l.b16 %v275
    %v795 = vunpack.c.l.b16 %v276
    %v796 = vunpack.c.l.b16 %v277
    %v797 = vunpack.c.l.b16 %v278
    %v798 = vunpack.c.l.b16 %v279
    %v799 = vunpack.c.l.b16 %v280
    %v800 = vunpack.c.l.b16 %v281
    %v801 = vunpack.c.l.b16 %v282
    %v802 = vunpack.c.l.b16 %v283
    %v803 = vunpack.c.l.b16 %v284
    %v804 = vunpack.c.l.b16 %v285
    %v805 = vunpack.c.l.b16 %v286
    %v806 = vunpack.c.l.b16 %v287
    %v807 = vunpack.c.l.b16 %v288
    %v808 = vunpack.c.l.b16 %v289
    %v809 = vunpack.c.l.b16 %v290
    %v810 = vunpack.c.l.b16 %v291
    %v811 = vunpack.c.l.b16 %v292
    %v812 = vunpack.c.l.b16 %v293
    %v813 = vunpack.c.l.b16 %v294
    %v814 = vunpack.c.l.b16 %v295
    %v815 = vunpack.c.l.b16 %v296
    %v816 = vunpack.c.l.b16 %v297
    %v817 = vunpack.c.l.b16 %v298
    %v818 = vunpack.c.l.b16 %v299
    %v819 = vunpack.c.l.b16 %v300
    %v820 = vunpack.c.l.b16 %v301
    %v821 = vunpack.c.l.b16 %v302
    %v822 = vunpack.c.l.b16 %v303
    %v823 = vunpack.c.l.b16 %v304
    %v824 = vunpack.c.l.b16 %v305
    %v825 = vunpack.c.l.b16 %v306
    %v826 = vunpack.c.l.b16 %v307
    %v827 = vunpack.c.l.b16 %v308
    %v828 = vunpack.c.l.b16 %v309
    %v829 = vunpack.c.l.b16 %v310
    %v830 = vunpack.c.l.b16 %v311
    %v831 = vunpack.c.l.b16 %v312
    %v832 = vunpack.c.l.b16 %v313
    %v833 = vunpack.c.l.b16 %v314
    %v834 = vunpack.c.l.b16 %v315
    %v835 = vunpack.c.l.b16 %v316
    %v836 = vunpack.c.l.b16 %v317
    %v837 = vunpack.c.l.b16 %v318
    %v838 = vunpack.c.l.b16 %v319
    %v839 = vunpack.c.l.b16 %v320
    %v840 = vunpack.c.l.b16 %v321
    %v841 = vunpack.c.l.b16 %v322
    %v842 = vunpack.c.l.b16 %v323
    %v843 = vunpack.c.l.b16 %v324
    %v844 = vunpack.c.l.b16 %v325
    %v845 = vunpack.c.l.b16 %v326
    %v846 = vunpack.c.l.b16 %v327
    %v847 = vunpack.c.l.b16 %v328
    %v848 = vunpack.c.l.b16 %v329
    %v849 = vunpack.c.l.b16 %v330
    %v850 = vunpack.c.l.b16 %v331
    %v851 = vunpack.c.l.b16 %v332
    %v852 = vunpack.c.l.b16 %v333
    %v853 = vunpack.c.l.b16 %v334
    %v854 = vunpack.c.l.b16 %v335
    %v855 = vunpack.c.l.b16 %v336
    %v856 = vunpack.c.l.b16 %v337
    %v857 = vunpack.c.l.b16 %v338
    %v858 = vunpack.c.l.b16 %v339
    %v859 = vunpack.c.l.b16 %v340
    %v860 = vunpack.c.l.b16 %v341
    %v861 = vunpack.c.l.b16 %v342
    %v862 = vunpack.c.l.b16 %v343
    %v863 = vunpack.c.l.b16 %v344
    %v864 = vunpack.c.l.b16 %v345
    %v865 = vunpack.c.l.b16 %v346
    %v866 = vunpack.c.l.b16 %v347
    %v867 = vunpack.c.l.b16 %v348
    %v868 = vunpack.c.l.b16 %v349
    %v869 = vunpack.c.l.b16 %v350
    %v870 = vunpack.c.l.b16 %v351
    %v871 = vunpack.c.l.b16 %v352
    %v872 = vunpack.c.l.b16 %v353
    %v873 = vunpack.c.l.b16 %v354
    %v874 = vunpack.c.l.b16 %v355
    %v875 = vunpack.c.l.b16 %v356
    %v876 = vunpack.c.l.b16 %v357
    %v877 = vunpack.c.l.b16 %v358
    %v878 = vunpack.c.l.b16 %v359
    %v879 = vunpack.c.l.b16 %v360
    %v880 = vunpack.c.l.b16 %v361
    %v881 = vunpack.c.l.b16 %v362
    %v882 = vunpack.c.l.b16 %v363
    %v883 = vunpack.c.l.b16 %v364
    %v884 = vunpack.c.l.b16 %v365
    %v885 = vunpack.c.l.b16 %v366
    %v886 = vunpack.c.l.b16 %v367
    %v887 = vunpack.c.l.b16 %v368
    %v888 = vunpack.c.l.b16 %v369
    %v889 = vunpack.c.l.b16 %v370
    %v890 = vunpack.c.l.b16 %v371
    %v891 = vunpack.c.l.b16 %v372
    %v892 = vunpack.c.l.b16 %v373
    %v893 = vunpack.c.l.b16 %v374
    %v894 = vunpack.c.l.b16 %v375
    %v895 = vunpack.c.l.b16 %v376
    %v896 = vunpack.c.l.b16 %v377
    %v897 = vunpack.c.l.b16 %v378
    %v898 = vunpack.c.l.b16 %v379
    %v899 = vunpack.c.l.b16 %v380
    %v900 = vunpack.c.l.b16 %v381
    %v901 = vunpack.c.l.b16 %v382
    %v902 = vunpack.c.l.b16 %v383
    %v903 = vunpack.c.l.b16 %v384
    %v904 = vunpack.c.l.b16 %v385
    %v905 = vunpack.c.l.b16 %v386
    %v906 = vunpack.c.l.b16 %v387
    %v907 = vunpack.c.l.b16 %v388
    %v908 = vunpack.c.l.b16 %v389
    %v909 = vunpack.c.l.b16 %v390
    %v910 = vunpack.c.l.b16 %v391
    %v911 = vunpack.c.l.b16 %v392
    %v912 = vunpack.c.l.b16 %v393
    %v913 = vpack.c.b16 %v658, %v657
    %v914 = vpack.c.b16 %v660, %v659
    %v915 = vpack.c.b16 %v662, %v661
    %v916 = vpack.c.b16 %v664, %v663
    %v917 = vpack.c.b16 %v666, %v665
    %v918 = vpack.c.b16 %v668, %v667
    %v919 = vpack.c.b16 %v670, %v669
    %v920 = vpack.c.b16 %v672, %v671
    %v921 = vpack.c.b16 %v674, %v673
    %v922 = vpack.c.b16 %v676, %v675
    %v923 = vpack.c.b16 %v678, %v677
    %v924 = vpack.c.b16 %v680, %v679
    %v925 = vpack.c.b16 %v682, %v681
    %v926 = vpack.c.b16 %v684, %v683
    %v927 = vpack.c.b16 %v686, %v685
    %v928 = vpack.c.b16 %v688, %v687
    %v929 = vpack.c.b16 %v690, %v689
    %v930 = vpack.c.b16 %v692, %v691
    %v931 = vpack.c.b16 %v694, %v693
    %v932 = vpack.c.b16 %v696, %v695
    %v933 = vpack.c.b16 %v698, %v697
    %v934 = vpack.c.b16 %v700, %v699
    %v935 = vpack.c.b16 %v702, %v701
    %v936 = vpack.c.b16 %v704, %v703
    %v937 = vpack.c.b16 %v706, %v705
    %v938 = vpack.c.b16 %v708, %v707
    %v939 = vpack.c.b16 %v710, %v709
    %v940 = vpack.c.b16 %v712, %v711
    %v941 = vpack.c.b16 %v714, %v713
    %v942 = vpack.c.b16 %v716, %v715
    %v943 = vpack.c.b16 %v718, %v717
    %v944 = vpack.c.b16 %v720, %v719
    %v945 = vpack.c.b16 %v722, %v721
    %v946 = vpack.c.b16 %v724, %v723
    %v947 = vpack.c.b16 %v726, %v725
    %v948 = vpack.c.b16 %v728, %v727
    %v949 = vpack.c.b16 %v730, %v729
    %v950 = vpack.c.b16 %v732, %v731
    %v951 = vpack.c.b16 %v734, %v733
    %v952 = vpack.c.b16 %v736, %v735
    %v953 = vpack.c.b16 %v738, %v737
    %v954 = vpack.c.b16 %v740, %v739
    %v955 = vpack.c.b16 %v742, %v741
    %v956 = vpack.c.b16 %v744, %v743
    %v957 = vpack.c.b16 %v746, %v745
    %v958 = vpack.c.b16 %v748, %v747
    %v959 = vpack.c.b16 %v750, %v749
    %v960 = vpack.c.b16 %v752, %v751
    %v961 = vpack.c.b16 %v754, %v753
    %v962 = vpack.c.b16 %v756, %v755
    %v963 = vpack.c.b16 %v758, %v757
    %v964 = vpack.c.b16 %v760, %v759
    %v965 = vpack.c.b16 %v762, %v761
    %v966 = vpack.c.b16 %v764, %v763
    %v967 = vpack.c.b16 %v766, %v765
    %v968 = vpack.c.b16 %v768, %v767
    %v969 = vpack.c.b16 %v770, %v769
    %v970 = vpack.c.b16 %v772, %v771
    %v971 = vpack.c.b16 %v774, %v773
    %v972 = vpack.c.b16 %v776, %v775
    %v973 = vpack.c.b16 %v778, %v777
    %v974 = vpack.c.b16 %v780, %v779
    %v975 = vpack.c.b16 %v782, %v781
    %v976 = vpack.c.b16 %v784, %v783
    %v977 = vpack.c.b16 %v786, %v785
    %v978 = vpack.c.b16 %v788, %v787
    %v979 = vpack.c.b16 %v790, %v789
    %v980 = vpack.c.b16 %v792, %v791
    %v981 = vpack.c.b16 %v794, %v793
    %v982 = vpack.c.b16 %v796, %v795
    %v983 = vpack.c.b16 %v798, %v797
    %v984 = vpack.c.b16 %v800, %v799
    %v985 = vpack.c.b16 %v802, %v801
    %v986 = vpack.c.b16 %v804, %v803
    %v987 = vpack.c.b16 %v806, %v805
    %v988 = vpack.c.b16 %v808, %v807
    %v989 = vpack.c.b16 %v810, %v809
    %v990 = vpack.c.b16 %v812, %v811
    %v991 = vpack.c.b16 %v814, %v813
    %v992 = vpack.c.b16 %v816, %v815
    %v993 = vpack.c.b16 %v818, %v817
    %v994 = vpack.c.b16 %v820, %v819
    %v995 = vpack.c.b16 %v822, %v821
    %v996 = vpack.c.b16 %v824, %v823
    %v997 = vpack.c.b16 %v826, %v825
    %v998 = vpack.c.b16 %v828, %v827
    %v999 = vpack.c.b16 %v830, %v829
    %v1000 = vpack.c.b16 %v832, %v831
    %v1001 = vpack.c.b16 %v834, %v833
    %v1002 = vpack.c.b16 %v836, %v835
    %v1003 = vpack.c.b16 %v838, %v837
    %v1004 = vpack.c.b16 %v840, %v839
    %v1005 = vpack.c.b16 %v842, %v841
    %v1006 = vpack.c.b16 %v844, %v843
    %v1007 = vpack.c.b16 %v846, %v845
    %v1008 = vpack.c.b16 %v848, %v847
    %v1009 = vpack.c.b16 %v850, %v849
    %v1010 = vpack.c.b16 %v852, %v851
    %v1011 = vpack.c.b16 %v854, %v853
    %v1012 = vpack.c.b16 %v856, %v855
    %v1013 = vpack.c.b16 %v858, %v857
    %v1014 = vpack.c.b16 %v860, %v859
    %v1015 = vpack.c.b16 %v862, %v861
    %v1016 = vpack.c.b16 %v864, %v863
    %v1017 = vpack.c.b16 %v866, %v865
    %v1018 = vpack.c.b16 %v868, %v867
    %v1019 = vpack.c.b16 %v870, %v869
    %v1020 = vpack.c.b16 %v872, %v871
    %v1021 = vpack.c.b16 %v874, %v873
    %v1022 = vpack.c.b16 %v876, %v875
    %v1023 = vpack.c.b16 %v878, %v877
    %v1024 = vpack.c.b16 %v880, %v879
    %v1025 = vpack.c.b16 %v882, %v881
    %v1026 = vpack.c.b16 %v884, %v883
    %v1027 = vpack.c.b16 %v886, %v885
    %v1028 = vpack.c.b16 %v888, %v887
    %v1029 = vpack.c.b16 %v890, %v889
    %v1030 = vpack.c.b16 %v892, %v891
    %v1031 = vpack.c.b16 %v894, %v893
    %v1032 = vpack.c.b16 %v896, %v895
    %v1033 = vpack.c.b16 %v898, %v897
    %v1034 = vpack.c.b16 %v900, %v899
    %v1035 = vpack.c.b16 %v902, %v901
    %v1036 = vpack.c.b16 %v904, %v903
    %v1037 = vpack.c.b16 %v906, %v905
    %v1038 = vpack.c.b16 %v908, %v907
    %v1039 = vpack.c.b16 %v910, %v909
    %v1040 = vpack.c.b16 %v912, %v911
    %1169 = vmatprep.subr.bf16.mxu0 0
    %1170 = vmatpush1.bf16.msra.mxu0 %v913
    %1171 = vmatprep.subr.bf16.mxu0 0
    %1172 = vmatpush1.bf16.msra.mxu0 %v914
    %1173 = vmatprep.subr.bf16.mxu0 0
    %1174 = vmatpush1.bf16.msra.mxu0 %v915
    %1175 = vmatprep.subr.bf16.mxu0 0
    %1176 = vmatpush1.bf16.msra.mxu0 %v916
    %1177 = vmatprep.subr.bf16.mxu0 0
    %1178 = vmatpush1.bf16.msra.mxu0 %v917
    %1179 = vmatprep.subr.bf16.mxu0 0
    %1180 = vmatpush1.bf16.msra.mxu0 %v918
    %1181 = vmatprep.subr.bf16.mxu0 0
    %1182 = vmatpush1.bf16.msra.mxu0 %v919
    %1183 = vmatprep.subr.bf16.mxu0 0
    %1184 = vmatpush1.bf16.msra.mxu0 %v920
    %1185 = vmatprep.subr.bf16.mxu0 0
    %1186 = vmatpush1.bf16.msra.mxu0 %v921
    %1187 = vmatprep.subr.bf16.mxu0 0
    %1188 = vmatpush1.bf16.msra.mxu0 %v922
    %1189 = vmatprep.subr.bf16.mxu0 0
    %1190 = vmatpush1.bf16.msra.mxu0 %v923
    %1191 = vmatprep.subr.bf16.mxu0 0
    %1192 = vmatpush1.bf16.msra.mxu0 %v924
    %1193 = vmatprep.subr.bf16.mxu0 0
    %1194 = vmatpush1.bf16.msra.mxu0 %v925
    %1195 = vmatprep.subr.bf16.mxu0 0
    %1196 = vmatpush1.bf16.msra.mxu0 %v926
    %1197 = vmatprep.subr.bf16.mxu0 0
    %1198 = vmatpush1.bf16.msra.mxu0 %v927
    %1199 = vmatprep.subr.bf16.mxu0 0
    %1200 = vmatpush1.bf16.msra.mxu0 %v928
    %1201 = vmatprep.mubr.bf16.mxu0 %v123
    %1202 = vmatmul.mubr.bf16.gmra.mrb[0].mxu0 %v122
    %v1203 = vpop.f32.mrb[0].mxu0
    %v1204 = vadd.f32 %v399, %v1203
    %v1205 = vpop.f32.mrb[0].mxu0
    %v1206 = vpop.f32.mrb[0].mxu0
    %v1207 = vpop.f32.mrb[0].mxu0
    %1208 = vdwg.mxu0
    %1209 = vmatprep.subr.bf16.mxu0 0
    %1210 = vmatpush1.bf16.msra.mxu0 %v929
    %1211 = vmatprep.subr.bf16.mxu0 0
    %1212 = vmatpush1.bf16.msra.mxu0 %v930
    %1213 = vmatprep.subr.bf16.mxu0 0
    %1214 = vmatpush1.bf16.msra.mxu0 %v931
    %1215 = vmatprep.subr.bf16.mxu0 0
    %1216 = vmatpush1.bf16.msra.mxu0 %v932
    %1217 = vmatprep.subr.bf16.mxu0 0
    %1218 = vmatpush1.bf16.msra.mxu0 %v933
    %1219 = vmatprep.subr.bf16.mxu0 0
    %1220 = vmatpush1.bf16.msra.mxu0 %v934
    %1221 = vmatprep.subr.bf16.mxu0 0
    %1222 = vmatpush1.bf16.msra.mxu0 %v935
    %1223 = vmatprep.subr.bf16.mxu0 0
    %1224 = vmatpush1.bf16.msra.mxu0 %v936
    %1225 = vmatprep.subr.bf16.mxu0 0
    %1226 = vmatpush1.bf16.msra.mxu0 %v937
    %1227 = vmatprep.subr.bf16.mxu0 0
    %1228 = vmatpush1.bf16.msra.mxu0 %v938
    %1229 = vmatprep.subr.bf16.mxu0 0
    %1230 = vmatpush1.bf16.msra.mxu0 %v939
    %1231 = vmatprep.subr.bf16.mxu0 0
    %1232 = vmatpush1.bf16.msra.mxu0 %v940
    %1233 = vmatprep.subr.bf16.mxu0 0
    %1234 = vmatpush1.bf16.msra.mxu0 %v941
    %1235 = vmatprep.subr.bf16.mxu0 0
    %1236 = vmatpush1.bf16.msra.mxu0 %v942
    %1237 = vmatprep.subr.bf16.mxu0 0
    %1238 = vmatpush1.bf16.msra.mxu0 %v943
    %1239 = vmatprep.subr.bf16.mxu0 0
    %1240 = vmatpush1.bf16.msra.mxu0 %v944
    %1241 = vmatprep.mubr.bf16.mxu0 %v125
    %1242 = vmatmul.mubr.bf16.gmra.mrb[0].mxu0 %v124
    %v1243 = vpop.f32.mrb[0].mxu0
    %v1244 = vadd.f32 %v1204, %v1243
    %v1245 = vpop.f32.mrb[0].mxu0
    %v1246 = vpop.f32.mrb[0].mxu0
    %v1247 = vpop.f32.mrb[0].mxu0
    %1248 = vdwg.mxu0
    %1249 = vmatprep.subr.bf16.mxu0 0
    %1250 = vmatpush1.bf16.msra.mxu0 %v945
    %1251 = vmatprep.subr.bf16.mxu0 0
    %1252 = vmatpush1.bf16.msra.mxu0 %v946
    %1253 = vmatprep.subr.bf16.mxu0 0
    %1254 = vmatpush1.bf16.msra.mxu0 %v947
    %1255 = vmatprep.subr.bf16.mxu0 0
    %1256 = vmatpush1.bf16.msra.mxu0 %v948
    %1257 = vmatprep.subr.bf16.mxu0 0
    %1258 = vmatpush1.bf16.msra.mxu0 %v949
    %1259 = vmatprep.subr.bf16.mxu0 0
    %1260 = vmatpush1.bf16.msra.mxu0 %v950
    %1261 = vmatprep.subr.bf16.mxu0 0
    %1262 = vmatpush1.bf16.msra.mxu0 %v951
    %1263 = vmatprep.subr.bf16.mxu0 0
    %1264 = vmatpush1.bf16.msra.mxu0 %v952
    %1265 = vmatprep.subr.bf16.mxu0 0
    %1266 = vmatpush1.bf16.msra.mxu0 %v953
    %1267 = vmatprep.subr.bf16.mxu0 0
    %1268 = vmatpush1.bf16.msra.mxu0 %v954
    %1269 = vmatprep.subr.bf16.mxu0 0
    %1270 = vmatpush1.bf16.msra.mxu0 %v955
    %1271 = vmatprep.subr.bf16.mxu0 0
    %1272 = vmatpush1.bf16.msra.mxu0 %v956
    %1273 = vmatprep.subr.bf16.mxu0 0
    %1274 = vmatpush1.bf16.msra.mxu0 %v957
    %1275 = vmatprep.subr.bf16.mxu0 0
    %1276 = vmatpush1.bf16.msra.mxu0 %v958
    %1277 = vmatprep.subr.bf16.mxu0 0
    %1278 = vmatpush1.bf16.msra.mxu0 %v959
    %1279 = vmatprep.subr.bf16.mxu0 0
    %1280 = vmatpush1.bf16.msra.mxu0 %v960
    %1281 = vmatprep.mubr.bf16.mxu0 %v127
    %1282 = vmatmul.mubr.bf16.gmra.mrb[0].mxu0 %v126
    %v1283 = vpop.f32.mrb[0].mxu0
    %v1284 = vadd.f32 %v1244, %v1283
    %v1285 = vpop.f32.mrb[0].mxu0
    %v1286 = vpop.f32.mrb[0].mxu0
    %v1287 = vpop.f32.mrb[0].mxu0
    %1288 = vdwg.mxu0
    %1289 = vmatprep.subr.bf16.mxu0 0
    %1290 = vmatpush1.bf16.msra.mxu0 %v961
    %1291 = vmatprep.subr.bf16.mxu0 0
    %1292 = vmatpush1.bf16.msra.mxu0 %v962
    %1293 = vmatprep.subr.bf16.mxu0 0
    %1294 = vmatpush1.bf16.msra.mxu0 %v963
    %1295 = vmatprep.subr.bf16.mxu0 0
    %1296 = vmatpush1.bf16.msra.mxu0 %v964
    %1297 = vmatprep.subr.bf16.mxu0 0
    %1298 = vmatpush1.bf16.msra.mxu0 %v965
    %1299 = vmatprep.subr.bf16.mxu0 0
    %1300 = vmatpush1.bf16.msra.mxu0 %v966
    %1301 = vmatprep.subr.bf16.mxu0 0
    %1302 = vmatpush1.bf16.msra.mxu0 %v967
    %1303 = vmatprep.subr.bf16.mxu0 0
    %1304 = vmatpush1.bf16.msra.mxu0 %v968
    %1305 = vmatprep.subr.bf16.mxu0 0
    %1306 = vmatpush1.bf16.msra.mxu0 %v969
    %1307 = vmatprep.subr.bf16.mxu0 0
    %1308 = vmatpush1.bf16.msra.mxu0 %v970
    %1309 = vmatprep.subr.bf16.mxu0 0
    %1310 = vmatpush1.bf16.msra.mxu0 %v971
    %1311 = vmatprep.subr.bf16.mxu0 0
    %1312 = vmatpush1.bf16.msra.mxu0 %v972
    %1313 = vmatprep.subr.bf16.mxu0 0
    %1314 = vmatpush1.bf16.msra.mxu0 %v973
    %1315 = vmatprep.subr.bf16.mxu0 0
    %1316 = vmatpush1.bf16.msra.mxu0 %v974
    %1317 = vmatprep.subr.bf16.mxu0 0
    %1318 = vmatpush1.bf16.msra.mxu0 %v975
    %1319 = vmatprep.subr.bf16.mxu0 0
    %1320 = vmatpush1.bf16.msra.mxu0 %v976
    %1321 = vmatprep.mubr.bf16.mxu0 %v129
    %1322 = vmatmul.mubr.bf16.gmra.mrb[0].mxu0 %v128
    %v1323 = vpop.f32.mrb[0].mxu0
    %v1324 = vadd.f32 %v1284, %v1323
    %v1325 = vpop.f32.mrb[0].mxu0
    %v1326 = vpop.f32.mrb[0].mxu0
    %v1327 = vpop.f32.mrb[0].mxu0
    %1328 = vdwg.mxu0
    %1329 = vmatprep.subr.bf16.mxu0 0
    %1330 = vmatpush1.bf16.msra.mxu0 %v977
    %1331 = vmatprep.subr.bf16.mxu0 0
    %1332 = vmatpush1.bf16.msra.mxu0 %v978
    %1333 = vmatprep.subr.bf16.mxu0 0
    %1334 = vmatpush1.bf16.msra.mxu0 %v979
    %1335 = vmatprep.subr.bf16.mxu0 0
    %1336 = vmatpush1.bf16.msra.mxu0 %v980
    %1337 = vmatprep.subr.bf16.mxu0 0
    %1338 = vmatpush1.bf16.msra.mxu0 %v981
    %1339 = vmatprep.subr.bf16.mxu0 0
    %1340 = vmatpush1.bf16.msra.mxu0 %v982
    %1341 = vmatprep.subr.bf16.mxu0 0
    %1342 = vmatpush1.bf16.msra.mxu0 %v983
    %1343 = vmatprep.subr.bf16.mxu0 0
    %1344 = vmatpush1.bf16.msra.mxu0 %v984
    %1345 = vmatprep.subr.bf16.mxu0 0
    %1346 = vmatpush1.bf16.msra.mxu0 %v985
    %1347 = vmatprep.subr.bf16.mxu0 0
    %1348 = vmatpush1.bf16.msra.mxu0 %v986
    %1349 = vmatprep.subr.bf16.mxu0 0
    %1350 = vmatpush1.bf16.msra.mxu0 %v987
    %1351 = vmatprep.subr.bf16.mxu0 0
    %1352 = vmatpush1.bf16.msra.mxu0 %v988
    %1353 = vmatprep.subr.bf16.mxu0 0
    %1354 = vmatpush1.bf16.msra.mxu0 %v989
    %1355 = vmatprep.subr.bf16.mxu0 0
    %1356 = vmatpush1.bf16.msra.mxu0 %v990
    %1357 = vmatprep.subr.bf16.mxu0 0
    %1358 = vmatpush1.bf16.msra.mxu0 %v991
    %1359 = vmatprep.subr.bf16.mxu0 0
    %1360 = vmatpush1.bf16.msra.mxu0 %v992
    %1361 = vmatprep.mubr.bf16.mxu0 %v131
    %1362 = vmatmul.mubr.bf16.gmra.mrb[0].mxu0 %v130
    %v1363 = vpop.f32.mrb[0].mxu0
    %v1364 = vadd.f32 %v1324, %v1363
    %v1365 = vpop.f32.mrb[0].mxu0
    %v1366 = vpop.f32.mrb[0].mxu0
    %v1367 = vpop.f32.mrb[0].mxu0
    %1368 = vdwg.mxu0
    %1369 = vmatprep.subr.bf16.mxu0 0
    %1370 = vmatpush1.bf16.msra.mxu0 %v993
    %1371 = vmatprep.subr.bf16.mxu0 0
    %1372 = vmatpush1.bf16.msra.mxu0 %v994
    %1373 = vmatprep.subr.bf16.mxu0 0
    %1374 = vmatpush1.bf16.msra.mxu0 %v995
    %1375 = vmatprep.subr.bf16.mxu0 0
    %1376 = vmatpush1.bf16.msra.mxu0 %v996
    %1377 = vmatprep.subr.bf16.mxu0 0
    %1378 = vmatpush1.bf16.msra.mxu0 %v997
    %1379 = vmatprep.subr.bf16.mxu0 0
    %1380 = vmatpush1.bf16.msra.mxu0 %v998
    %1381 = vmatprep.subr.bf16.mxu0 0
    %1382 = vmatpush1.bf16.msra.mxu0 %v999
    %1383 = vmatprep.subr.bf16.mxu0 0
    %1384 = vmatpush1.bf16.msra.mxu0 %v1000
    %1385 = vmatprep.subr.bf16.mxu0 0
    %1386 = vmatpush1.bf16.msra.mxu0 %v1001
    %1387 = vmatprep.subr.bf16.mxu0 0
    %1388 = vmatpush1.bf16.msra.mxu0 %v1002
    %1389 = vmatprep.subr.bf16.mxu0 0
    %1390 = vmatpush1.bf16.msra.mxu0 %v1003
    %1391 = vmatprep.subr.bf16.mxu0 0
    %1392 = vmatpush1.bf16.msra.mxu0 %v1004
    %1393 = vmatprep.subr.bf16.mxu0 0
    %1394 = vmatpush1.bf16.msra.mxu0 %v1005
    %1395 = vmatprep.subr.bf16.mxu0 0
    %1396 = vmatpush1.bf16.msra.mxu0 %v1006
    %1397 = vmatprep.subr.bf16.mxu0 0
    %1398 = vmatpush1.bf16.msra.mxu0 %v1007
    %1399 = vmatprep.subr.bf16.mxu0 0
    %1400 = vmatpush1.bf16.msra.mxu0 %v1008
    %1401 = vmatprep.mubr.bf16.mxu0 %v133
    %1402 = vmatmul.mubr.bf16.gmra.mrb[0].mxu0 %v132
    %v1403 = vpop.f32.mrb[0].mxu0
    %v1404 = vadd.f32 %v1364, %v1403
    %v1405 = vpop.f32.mrb[0].mxu0
    %v1406 = vpop.f32.mrb[0].mxu0
    %v1407 = vpop.f32.mrb[0].mxu0
    %1408 = vdwg.mxu0
    %1409 = vmatprep.subr.bf16.mxu0 0
    %1410 = vmatpush1.bf16.msra.mxu0 %v1009
    %1411 = vmatprep.subr.bf16.mxu0 0
    %1412 = vmatpush1.bf16.msra.mxu0 %v1010
    %1413 = vmatprep.subr.bf16.mxu0 0
    %1414 = vmatpush1.bf16.msra.mxu0 %v1011
    %1415 = vmatprep.subr.bf16.mxu0 0
    %1416 = vmatpush1.bf16.msra.mxu0 %v1012
    %1417 = vmatprep.subr.bf16.mxu0 0
    %1418 = vmatpush1.bf16.msra.mxu0 %v1013
    %1419 = vmatprep.subr.bf16.mxu0 0
    %1420 = vmatpush1.bf16.msra.mxu0 %v1014
    %1421 = vmatprep.subr.bf16.mxu0 0
    %1422 = vmatpush1.bf16.msra.mxu0 %v1015
    %1423 = vmatprep.subr.bf16.mxu0 0
    %1424 = vmatpush1.bf16.msra.mxu0 %v1016
    %1425 = vmatprep.subr.bf16.mxu0 0
    %1426 = vmatpush1.bf16.msra.mxu0 %v1017
    %1427 = vmatprep.subr.bf16.mxu0 0
    %1428 = vmatpush1.bf16.msra.mxu0 %v1018
    %1429 = vmatprep.subr.bf16.mxu0 0
    %1430 = vmatpush1.bf16.msra.mxu0 %v1019
    %1431 = vmatprep.subr.bf16.mxu0 0
    %1432 = vmatpush1.bf16.msra.mxu0 %v1020
    %1433 = vmatprep.subr.bf16.mxu0 0
    %1434 = vmatpush1.bf16.msra.mxu0 %v1021
    %1435 = vmatprep.subr.bf16.mxu0 0
    %1436 = vmatpush1.bf16.msra.mxu0 %v1022
    %1437 = vmatprep.subr.bf16.mxu0 0
    %1438 = vmatpush1.bf16.msra.mxu0 %v1023
    %1439 = vmatprep.subr.bf16.mxu0 0
    %1440 = vmatpush1.bf16.msra.mxu0 %v1024
    %1441 = vmatprep.mubr.bf16.mxu0 %v135
    %1442 = vmatmul.mubr.bf16.gmra.mrb[0].mxu0 %v134
    %v1443 = vpop.f32.mrb[0].mxu0
    %v1444 = vadd.f32 %v1404, %v1443
    %v1445 = vpop.f32.mrb[0].mxu0
    %v1446 = vpop.f32.mrb[0].mxu0
    %v1447 = vpop.f32.mrb[0].mxu0
    %1448 = vdwg.mxu0
    %1449 = vmatprep.subr.bf16.mxu0 0
    %1450 = vmatpush1.bf16.msra.mxu0 %v1025
    %1451 = vmatprep.subr.bf16.mxu0 0
    %1452 = vmatpush1.bf16.msra.mxu0 %v1026
    %1453 = vmatprep.subr.bf16.mxu0 0
    %1454 = vmatpush1.bf16.msra.mxu0 %v1027
    %1455 = vmatprep.subr.bf16.mxu0 0
    %1456 = vmatpush1.bf16.msra.mxu0 %v1028
    %1457 = vmatprep.subr.bf16.mxu0 0
    %1458 = vmatpush1.bf16.msra.mxu0 %v1029
    %1459 = vmatprep.subr.bf16.mxu0 0
    %1460 = vmatpush1.bf16.msra.mxu0 %v1030
    %1461 = vmatprep.subr.bf16.mxu0 0
    %1462 = vmatpush1.bf16.msra.mxu0 %v1031
    %1463 = vmatprep.subr.bf16.mxu0 0
    %1464 = vmatpush1.bf16.msra.mxu0 %v1032
    %1465 = vmatprep.subr.bf16.mxu0 0
    %1466 = vmatpush1.bf16.msra.mxu0 %v1033
    %1467 = vmatprep.subr.bf16.mxu0 0
    %1468 = vmatpush1.bf16.msra.mxu0 %v1034
    %1469 = vmatprep.subr.bf16.mxu0 0
    %1470 = vmatpush1.bf16.msra.mxu0 %v1035
    %1471 = vmatprep.subr.bf16.mxu0 0
    %1472 = vmatpush1.bf16.msra.mxu0 %v1036
    %1473 = vmatprep.subr.bf16.mxu0 0
    %1474 = vmatpush1.bf16.msra.mxu0 %v1037
    %1475 = vmatprep.subr.bf16.mxu0 0
    %1476 = vmatpush1.bf16.msra.mxu0 %v1038
    %1477 = vmatprep.subr.bf16.mxu0 0
    %1478 = vmatpush1.bf16.msra.mxu0 %v1039
    %1479 = vmatprep.subr.bf16.mxu0 0
    %1480 = vmatpush1.bf16.msra.mxu0 %v1040
    %1481 = vmatprep.mubr.bf16.mxu0 %v137
    %1482 = vmatmul.mubr.bf16.gmra.mrb[0].mxu0 %v136
    %v1483 = vpop.f32.mrb[0].mxu0
    %v1484 = vadd.f32 %v1444, %v1483
    %v1485 = vpop.f32.mrb[0].mxu0
    %v1486 = vpop.f32.mrb[0].mxu0
    %v1487 = vpop.f32.mrb[0].mxu0
    %1488 = vdwg.mxu0
    %1489 = vst [vmem:[#allocation5] sm:$0x3] %v1484
    // Predicated region
    $region18: #{net_forward.1} parent=1 // pred_check
      _
    $region19: #{net_forward.1} parent=1 // pred_check_branch
      %1491 = sbr.rel (0) target = $region21
    $region20: #{net_forward.1} parent=1 // pred_region
      %s1493 = ssub.s32 32, 32
      %1494 = vsyncadd [#allocation4], %s1493
      %s1496 = sshll.u32 [#allocation5], 4
      %s1497 = int_to_ptr.vmem [resolvable:$true] %s1496
      %1499 = dma.vmem_to_hbm [thread:$0]  %s1497, 32, %s3, [#allocation4]
    $region21: #{net_forward.1} parent=1 // pred_fallthru
      _
    // Predicated region
    $region22: #{net_forward.1} parent=1 // pred_check
      _
    $region23: #{net_forward.1} parent=1 // pred_check_branch
      %1501 = sbr.rel (0) target = $region25
    $region24: #{net_forward.1} parent=1 // pred_region
      %1502 = dma.done [#allocation4], 32
    $region25: #{net_forward.1} parent=1 // pred_fallthru
      _
    %1503 = vsyncpa [#allocation3], 1
    %1504 = vsyncpa [#allocation4], 1

</llo_original>
